<compile_context>
chip_gen: v7x
topology: tpu7x:2x2x1
jax: 0.10.0
libtpu: 0.0.40
codegen_flags: <defaults>
</compile_context>

<pallas_src>
import math
import functools

import jax
import jax.numpy as jnp
import numpy as np
from jax import lax
from jax.experimental import pallas as pl
from jax.experimental.pallas import tpu as pltpu

LN_EPS = 1e-5  # nn.LayerNorm default


def _pad_to(v, m):
    return ((v + m - 1) // m) * m


def _make_mlp_kernel(d_true, h_true, compute_dtype):
    """Kernel factory: true feature dims are baked in as compile-time constants."""
    inv_d = np.float32(1.0 / d_true)
    inv_h = np.float32(1.0 / h_true)
    inv_sqrt2 = np.float32(1.0 / math.sqrt(2.0))

    def kernel(x_ref, g1_ref, b1_ref, w1_ref, fb1_ref,
               g2_ref, b2_ref, w2_ref, fb2_ref, o_ref):
        x = x_ref[...].astype(jnp.float32)

        # --- LayerNorm 1 over the (padded) last axis ---------------------------
        # Padded lanes of x are zero, so sums over the padded axis equal sums over
        # the true axis; dividing by the true D (mul by 1/D constant, no divide)
        # reproduces nn.LayerNorm exactly.  Padded gamma/beta are zero, so padded
        # lanes of xh are zeroed before the matmul.
        s1 = jnp.sum(x, axis=-1, keepdims=True)
        s2 = jnp.sum(x * x, axis=-1, keepdims=True)
        mu = s1 * inv_d
        var = jnp.maximum(s2 * inv_d - mu * mu, 0.0)
        xh = (x - mu) * lax.rsqrt(var + LN_EPS)
        xh = xh * g1_ref[...] + b1_ref[...]

        # --- fc1: (tm, Dp) @ (Dp, Hp) + (1, Hp)  (bf16 inputs, f32 accumulate) --
        h = jnp.dot(xh.astype(compute_dtype), w1_ref[...],
                    preferred_element_type=jnp.float32) + fb1_ref[...]

        # --- exact GELU (matches nn.GELU(approximate='none')) -------------------
        h = 0.5 * h * (1.0 + lax.erf(h * inv_sqrt2))

        # --- LayerNorm 2 (same padded-lane treatment, true H constants) ---------
        t1 = jnp.sum(h, axis=-1, keepdims=True)
        t2 = jnp.sum(h * h, axis=-1, keepdims=True)
        mu2 = t1 * inv_h
        var2 = jnp.maximum(t2 * inv_h - mu2 * mu2, 0.0)
        hh = (h - mu2) * lax.rsqrt(var2 + LN_EPS)
        hh = hh * g2_ref[...] + b2_ref[...]

        # dropout p=0.0 -> identity (drop1 / drop2 are no-ops)

        # --- fc2: (tm, Hp) @ (Hp, Op) + (1, Op) ----------------------------------
        out = jnp.dot(hh.astype(compute_dtype), w2_ref[...],
                      preferred_element_type=jnp.float32) + fb2_ref[...]
        o_ref[...] = out.astype(o_ref.dtype)

    return kernel


def mlp_pallas(x, params, *, tm=256, compute_dtype=jnp.bfloat16):
    """x: (B, S, D) float32.  params: dict of f32 JAX arrays (see init_params)."""
    B, S, D = x.shape
    H = params["w1"].shape[1]
    O = params["w2"].shape[1]
    M = B * S

    # Lane-dense padded dims (features are on the lane axis) and token tiling.
    Dp, Hp, Op = _pad_to(D, 128), _pad_to(H, 128), _pad_to(O, 128)
    tm = min(tm, _pad_to(M, 8))          # never make a tile larger than the padded input
    Mp = _pad_to(M, tm)

    xf = x.reshape(M, D).astype(jnp.float32)
    if (Mp, Dp) != (M, D):
        xf = jnp.pad(xf, ((0, Mp - M), (0, Dp - D)))

    def pad2(a, r, c):
        return jnp.pad(a, ((0, r - a.shape[0]), (0, c - a.shape[1])))

    # Zero-padded params: padded gamma/beta lanes = 0 zero out padded activations;
    # padded weight rows/cols = 0 contribute nothing to the matmuls.
    g1 = pad2(params["g1"], 1, Dp)
    b1 = pad2(params["b1"], 1, Dp)
    w1 = pad2(params["w1"], Dp, Hp).astype(compute_dtype)   # bf16 in HBM: half the DMA bytes
    fb1 = pad2(params["fb1"], 1, Hp)
    g2 = pad2(params["g2"], 1, Hp)
    b2 = pad2(params["b2"], 1, Hp)
    w2 = pad2(params["w2"], Hp, Op).astype(compute_dtype)
    fb2 = pad2(params["fb2"], 1, Op)

    kernel = _make_mlp_kernel(D, H, compute_dtype)

    # Explicit VMEM budget: streamed x/out tiles double-buffered, resident weights
    # single-buffered, plus live f32 intermediates; generous headroom, clamped so it
    # stays reasonable on v7x (64 MiB physical) while above the 16/32 MiB defaults.
    c_bytes = jnp.dtype(compute_dtype).itemsize
    vmem_est = (
        2 * tm * Dp * 4                       # x tiles (double buffered)
        + 2 * tm * Op * 4                     # out tiles (double buffered)
        + (Dp * Hp + Hp * Op) * c_bytes       # resident weights (single buffered)
        + (2 * Dp + 3 * Hp + 2 * Op) * 4 * 2  # gammas / betas / biases
        + 2 * tm * (Dp + Hp) * 4              # live f32 intermediates (xh, h, hh)
    )
    vmem_limit = int(min(max(vmem_est * 3 // 2 + (4 << 20), 32 << 20), 96 << 20))

    cost = pl.CostEstimate(
        flops=2 * M * (D * H + H * O),
        transcendentals=M * H + 2 * M,                       # erf + two rsqrt paths
        bytes_accessed=int(M * (D + O) * 4 + (D * H + H * O) * c_bytes
                           + (2 * D + 3 * H + 2 * O) * 4),
    )

    def build_call(weight_buffers):
        if weight_buffers is None:
            resident = lambda shape: pl.BlockSpec(shape, lambda i: (0, 0))
        else:
            # Constant-index blocks never change -> single-buffer them to halve
            # their VMEM residency (important on v7x's 64 MiB VMEM).
            resident = lambda shape: pl.BlockSpec(
                shape, lambda i: (0, 0), pipeline_mode=pl.Buffered(weight_buffers))
        return pl.pallas_call(
            kernel,
            out_shape=jax.ShapeDtypeStruct((Mp, Op), x.dtype),
            grid_spec=pltpu.PrefetchScalarGridSpec(
                num_scalar_prefetch=0,
                grid=(Mp // tm,),
                in_specs=[
                    pl.BlockSpec((tm, Dp), lambda i: (i, 0)),   # x tile (streamed)
                    resident((1, Dp)), resident((1, Dp)),       # ln1 gamma, beta
                    resident((Dp, Hp)), resident((1, Hp)),      # fc1 W, b
                    resident((1, Hp)), resident((1, Hp)),       # ln2 gamma, beta
                    resident((Hp, Op)), resident((1, Op)),      # fc2 W, b
                ],
                out_specs=pl.BlockSpec((tm, Op), lambda i: (i, 0)),
            ),
            compiler_params=pltpu.CompilerParams(
                dimension_semantics=("parallel",),              # shard token tiles across TCs
                vmem_limit_bytes=vmem_limit,
            ),
            cost_estimate=cost,
        )

    args = (xf, g1, b1, w1, fb1, g2, b2, w2, fb2)
    try:
        out = build_call(1)(*args)
    except Exception:
        # Fallback for JAX builds without pipeline_mode / Buffered(1) support.
        out = build_call(None)(*args)

    return out[:M, :O].reshape(B, S, O)


def init_params(key, in_features, hidden_features=None, out_features=None, gamma=1.0):
    """Deterministic synthetic init mirroring Mlp.__init__ / _init_weights."""
    hidden_features = hidden_features or in_features
    out_features = out_features or in_features
    k1, k2, k3, k4 = jax.random.split(key, 4)

    def xavier_normal(k, fan_in, fan_out):
        std = gamma * math.sqrt(2.0 / (fan_in + fan_out))
        return std * jax.random.normal(k, (fan_in, fan_out), jnp.float32)

    # fc weights stored as (in, out) so the kernel computes x @ W (same math as
    # PyTorch's x @ weight.T with weight of shape (out, in)).
    w1 = xavier_normal(k1, in_features, hidden_features)
    w2 = xavier_normal(k2, hidden_features, out_features)
    fb1 = 0.02 * jax.random.normal(k3, (1, hidden_features), jnp.float32)
    fb2 = 0.02 * jax.random.normal(k4, (1, out_features), jnp.float32)
    return dict(
        g1=jnp.ones((1, in_features), jnp.float32),
        b1=jnp.zeros((1, in_features), jnp.float32),
        w1=w1, fb1=fb1,
        g2=jnp.ones((1, hidden_features), jnp.float32),
        b2=jnp.zeros((1, hidden_features), jnp.float32),
        w2=w2, fb2=fb2,
    )


def mlp_reference(x, p):
    """Pure-JAX reference of the PyTorch forward (for a sanity check)."""
    def ln(v, g, b):
        mu = jnp.mean(v, axis=-1, keepdims=True)
        var = jnp.mean((v - mu) ** 2, axis=-1, keepdims=True)
        return (v - mu) * lax.rsqrt(var + LN_EPS) * g + b

    h = ln(x, p["g1"][0], p["b1"][0]) @ p["w1"] + p["fb1"][0]
    h = 0.5 * h * (1.0 + lax.erf(h / jnp.sqrt(2.0)))
    h = ln(h, p["g2"][0], p["b2"][0])
    return h @ p["w2"] + p["fb2"][0]


if __name__ == "__main__":
    key = jax.random.PRNGKey(0)
    kx, kp = jax.random.split(key)

    B, S, D, Hid = 2, 8, 32, 64  # small shapes: batch=2, seq=8, in=32, hidden=64
    x = jax.random.normal(kx, (B, S, D), jnp.float32)
    params = init_params(kp, in_features=D, hidden_features=Hid, out_features=D)

    y_ref = mlp_reference(x, params)

    # f32 MXU path: tight check against the PyTorch-equivalent reference.
    y32 = jax.block_until_ready(mlp_pallas(x, params, compute_dtype=jnp.float32))
    assert y32.shape == (B, S, D)
    np.testing.assert_allclose(np.asarray(y32), np.asarray(y_ref), rtol=1e-4, atol=1e-4)

    # Default fast path: bf16 MXU inputs with f32 accumulation (looser tolerance).
    y = jax.block_until_ready(mlp_pallas(x, params))
    assert y.shape == (B, S, D)
    np.testing.assert_allclose(np.asarray(y), np.asarray(y_ref), rtol=2e-2, atol=2e-2)

    print("KERNEL_OK")
</pallas_src>

<mosaic_0001>
module attributes {stable_mosaic.version = 11 : i64} {
  func.func @kernel(%arg0: i32, %arg1: memref<16x128xf32, #tpu.memory_space<vmem>>, %arg2: memref<1x128xf32, #tpu.memory_space<vmem>>, %arg3: memref<1x128xf32, #tpu.memory_space<vmem>>, %arg4: memref<128x128xf32, #tpu.memory_space<vmem>>, %arg5: memref<1x128xf32, #tpu.memory_space<vmem>>, %arg6: memref<1x128xf32, #tpu.memory_space<vmem>>, %arg7: memref<1x128xf32, #tpu.memory_space<vmem>>, %arg8: memref<128x128xf32, #tpu.memory_space<vmem>>, %arg9: memref<1x128xf32, #tpu.memory_space<vmem>>, %arg10: memref<16x128xf32, #tpu.memory_space<vmem>>) attributes {dimension_semantics = [#tpu.dimension_semantics<parallel>], iteration_bounds = array<i64: 1>, scalar_prefetch = 0 : i64, scratch_operands = 0 : i64, tpu.core_type = #tpu.core_type<tc>, window_params = [{transform_indices = @transform_0, window_bounds = array<i64: 16, 128>}, {pipeline_mode = #tpu.pipeline_mode<synchronous>, transform_indices = @transform_1, window_bounds = array<i64: 1, 128>}, {pipeline_mode = #tpu.pipeline_mode<synchronous>, transform_indices = @transform_2, window_bounds = array<i64: 1, 128>}, {pipeline_mode = #tpu.pipeline_mode<synchronous>, transform_indices = @transform_3, window_bounds = array<i64: 128, 128>}, {pipeline_mode = #tpu.pipeline_mode<synchronous>, transform_indices = @transform_4, window_bounds = array<i64: 1, 128>}, {pipeline_mode = #tpu.pipeline_mode<synchronous>, transform_indices = @transform_5, window_bounds = array<i64: 1, 128>}, {pipeline_mode = #tpu.pipeline_mode<synchronous>, transform_indices = @transform_6, window_bounds = array<i64: 1, 128>}, {pipeline_mode = #tpu.pipeline_mode<synchronous>, transform_indices = @transform_7, window_bounds = array<i64: 128, 128>}, {pipeline_mode = #tpu.pipeline_mode<synchronous>, transform_indices = @transform_8, window_bounds = array<i64: 1, 128>}, {transform_indices = @transform_9, window_bounds = array<i64: 16, 128>}]} {
    %c0 = arith.constant 0 : index
    %c0_0 = arith.constant 0 : index
    %0 = vector.load %arg1[%c0, %c0_0] : memref<16x128xf32, #tpu.memory_space<vmem>>, vector<16x128xf32>
    %cst = arith.constant dense<0.000000e+00> : vector<16xf32>
    %1 = vector.multi_reduction <add>, %0, %cst [1] : vector<16x128xf32> to vector<16xf32>
    %2 = vector.shape_cast %1 : vector<16xf32> to vector<16x1xf32>
    %3 = arith.mulf %0, %0 : vector<16x128xf32>
    %cst_1 = arith.constant dense<0.000000e+00> : vector<16xf32>
    %4 = vector.multi_reduction <add>, %3, %cst_1 [1] : vector<16x128xf32> to vector<16xf32>
    %5 = vector.shape_cast %4 : vector<16xf32> to vector<16x1xf32>
    %cst_2 = arith.constant 3.125000e-02 : f32
    %6 = vector.broadcast %cst_2 : f32 to vector<16x1xf32>
    %7 = arith.mulf %2, %6 : vector<16x1xf32>
    %cst_3 = arith.constant 3.125000e-02 : f32
    %8 = vector.broadcast %cst_3 : f32 to vector<16x1xf32>
    %9 = arith.mulf %5, %8 : vector<16x1xf32>
    %10 = arith.mulf %7, %7 : vector<16x1xf32>
    %11 = arith.subf %9, %10 : vector<16x1xf32>
    %cst_4 = arith.constant 0.000000e+00 : f32
    %12 = vector.broadcast %cst_4 : f32 to vector<16x1xf32>
    %13 = arith.maximumf %11, %12 : vector<16x1xf32>
    %14 = vector.broadcast %7 : vector<16x1xf32> to vector<16x128xf32>
    %15 = arith.subf %0, %14 : vector<16x128xf32>
    %cst_5 = arith.constant 9.99999974E-6 : f32
    %16 = vector.broadcast %cst_5 : f32 to vector<16x1xf32>
    %17 = arith.addf %13, %16 : vector<16x1xf32>
    %18 = math.rsqrt %17 : vector<16x1xf32>
    %19 = vector.broadcast %18 : vector<16x1xf32> to vector<16x128xf32>
    %20 = arith.mulf %15, %19 : vector<16x128xf32>
    %c0_6 = arith.constant 0 : index
    %c0_7 = arith.constant 0 : index
    %21 = vector.load %arg2[%c0_6, %c0_7] : memref<1x128xf32, #tpu.memory_space<vmem>>, vector<1x128xf32>
    %22 = vector.broadcast %21 : vector<1x128xf32> to vector<16x128xf32>
    %23 = arith.mulf %20, %22 : vector<16x128xf32>
    %c0_8 = arith.constant 0 : index
    %c0_9 = arith.constant 0 : index
    %24 = vector.load %arg3[%c0_8, %c0_9] : memref<1x128xf32, #tpu.memory_space<vmem>>, vector<1x128xf32>
    %25 = vector.broadcast %24 : vector<1x128xf32> to vector<16x128xf32>
    %26 = arith.addf %23, %25 : vector<16x128xf32>
    %c0_10 = arith.constant 0 : index
    %c0_11 = arith.constant 0 : index
    %27 = vector.load %arg4[%c0_10, %c0_11] : memref<128x128xf32, #tpu.memory_space<vmem>>, vector<128x128xf32>
    %cst_12 = arith.constant dense<0.000000e+00> : vector<16x128xf32>
    %28 = tpu.matmul %26, %27, %cst_12 {dimension_numbers = #tpu.dot_dimension_numbers<[1], [0], [0], [1], [0, 0, 1, 1], [], []>} : vector<16x128xf32>, vector<128x128xf32>, vector<16x128xf32> -> vector<16x128xf32>
    %c0_13 = arith.constant 0 : index
    %c0_14 = arith.constant 0 : index
    %29 = vector.load %arg5[%c0_13, %c0_14] : memref<1x128xf32, #tpu.memory_space<vmem>>, vector<1x128xf32>
    %30 = vector.broadcast %29 : vector<1x128xf32> to vector<16x128xf32>
    %31 = arith.addf %28, %30 : vector<16x128xf32>
    %cst_15 = arith.constant 5.000000e-01 : f32
    %32 = vector.broadcast %cst_15 : f32 to vector<16x128xf32>
    %33 = arith.mulf %32, %31 : vector<16x128xf32>
    %cst_16 = arith.constant 0.707106769 : f32
    %34 = vector.broadcast %cst_16 : f32 to vector<16x128xf32>
    %35 = arith.mulf %31, %34 : vector<16x128xf32>
    %36 = math.erf %35 : vector<16x128xf32>
    %cst_17 = arith.constant 1.000000e+00 : f32
    %37 = vector.broadcast %cst_17 : f32 to vector<16x128xf32>
    %38 = arith.addf %37, %36 : vector<16x128xf32>
    %39 = arith.mulf %33, %38 : vector<16x128xf32>
    %cst_18 = arith.constant dense<0.000000e+00> : vector<16xf32>
    %40 = vector.multi_reduction <add>, %39, %cst_18 [1] : vector<16x128xf32> to vector<16xf32>
    %41 = vector.shape_cast %40 : vector<16xf32> to vector<16x1xf32>
    %42 = arith.mulf %39, %39 : vector<16x128xf32>
    %cst_19 = arith.constant dense<0.000000e+00> : vector<16xf32>
    %43 = vector.multi_reduction <add>, %42, %cst_19 [1] : vector<16x128xf32> to vector<16xf32>
    %44 = vector.shape_cast %43 : vector<16xf32> to vector<16x1xf32>
    %cst_20 = arith.constant 1.562500e-02 : f32
    %45 = vector.broadcast %cst_20 : f32 to vector<16x1xf32>
    %46 = arith.mulf %41, %45 : vector<16x1xf32>
    %cst_21 = arith.constant 1.562500e-02 : f32
    %47 = vector.broadcast %cst_21 : f32 to vector<16x1xf32>
    %48 = arith.mulf %44, %47 : vector<16x1xf32>
    %49 = arith.mulf %46, %46 : vector<16x1xf32>
    %50 = arith.subf %48, %49 : vector<16x1xf32>
    %cst_22 = arith.constant 0.000000e+00 : f32
    %51 = vector.broadcast %cst_22 : f32 to vector<16x1xf32>
    %52 = arith.maximumf %50, %51 : vector<16x1xf32>
    %53 = vector.broadcast %46 : vector<16x1xf32> to vector<16x128xf32>
    %54 = arith.subf %39, %53 : vector<16x128xf32>
    %cst_23 = arith.constant 9.99999974E-6 : f32
    %55 = vector.broadcast %cst_23 : f32 to vector<16x1xf32>
    %56 = arith.addf %52, %55 : vector<16x1xf32>
    %57 = math.rsqrt %56 : vector<16x1xf32>
    %58 = vector.broadcast %57 : vector<16x1xf32> to vector<16x128xf32>
    %59 = arith.mulf %54, %58 : vector<16x128xf32>
    %c0_24 = arith.constant 0 : index
    %c0_25 = arith.constant 0 : index
    %60 = vector.load %arg6[%c0_24, %c0_25] : memref<1x128xf32, #tpu.memory_space<vmem>>, vector<1x128xf32>
    %61 = vector.broadcast %60 : vector<1x128xf32> to vector<16x128xf32>
    %62 = arith.mulf %59, %61 : vector<16x128xf32>
    %c0_26 = arith.constant 0 : index
    %c0_27 = arith.constant 0 : index
    %63 = vector.load %arg7[%c0_26, %c0_27] : memref<1x128xf32, #tpu.memory_space<vmem>>, vector<1x128xf32>
    %64 = vector.broadcast %63 : vector<1x128xf32> to vector<16x128xf32>
    %65 = arith.addf %62, %64 : vector<16x128xf32>
    %c0_28 = arith.constant 0 : index
    %c0_29 = arith.constant 0 : index
    %66 = vector.load %arg8[%c0_28, %c0_29] : memref<128x128xf32, #tpu.memory_space<vmem>>, vector<128x128xf32>
    %cst_30 = arith.constant dense<0.000000e+00> : vector<16x128xf32>
    %67 = tpu.matmul %65, %66, %cst_30 {dimension_numbers = #tpu.dot_dimension_numbers<[1], [0], [0], [1], [0, 0, 1, 1], [], []>} : vector<16x128xf32>, vector<128x128xf32>, vector<16x128xf32> -> vector<16x128xf32>
    %c0_31 = arith.constant 0 : index
    %c0_32 = arith.constant 0 : index
    %68 = vector.load %arg9[%c0_31, %c0_32] : memref<1x128xf32, #tpu.memory_space<vmem>>, vector<1x128xf32>
    %69 = vector.broadcast %68 : vector<1x128xf32> to vector<16x128xf32>
    %70 = arith.addf %67, %69 : vector<16x128xf32>
    %c0_33 = arith.constant 0 : index
    %c0_34 = arith.constant 0 : index
    %71 = vector.load %arg10[%c0_33, %c0_34] : memref<16x128xf32, #tpu.memory_space<vmem>>, vector<16x128xf32>
    tpu.vector_store %arg10[%c0_33, %c0_34], %70 {strides = array<i32>} : memref<16x128xf32, #tpu.memory_space<vmem>>, vector<16x128xf32>,
    return
  }
  func.func @transform_0(%arg0: i32) -> (i32, i32) {
    %c0_i32 = arith.constant 0 : i32
    %c0_i32_0 = arith.constant 0 : i32
    return %arg0, %c0_i32 : i32, i32
  }
  func.func @transform_1(%arg0: i32) -> (i32, i32) {
    %c0_i32 = arith.constant 0 : i32
    %c0_i32_0 = arith.constant 0 : i32
    %c0_i32_1 = arith.constant 0 : i32
    return %c0_i32, %c0_i32_0 : i32, i32
  }
  func.func @transform_2(%arg0: i32) -> (i32, i32) {
    %c0_i32 = arith.constant 0 : i32
    %c0_i32_0 = arith.constant 0 : i32
    %c0_i32_1 = arith.constant 0 : i32
    return %c0_i32, %c0_i32_0 : i32, i32
  }
  func.func @transform_3(%arg0: i32) -> (i32, i32) {
    %c0_i32 = arith.constant 0 : i32
    %c0_i32_0 = arith.constant 0 : i32
    %c0_i32_1 = arith.constant 0 : i32
    return %c0_i32, %c0_i32_0 : i32, i32
  }
  func.func @transform_4(%arg0: i32) -> (i32, i32) {
    %c0_i32 = arith.constant 0 : i32
    %c0_i32_0 = arith.constant 0 : i32
    %c0_i32_1 = arith.constant 0 : i32
    return %c0_i32, %c0_i32_0 : i32, i32
  }
  func.func @transform_5(%arg0: i32) -> (i32, i32) {
    %c0_i32 = arith.constant 0 : i32
    %c0_i32_0 = arith.constant 0 : i32
    %c0_i32_1 = arith.constant 0 : i32
    return %c0_i32, %c0_i32_0 : i32, i32
  }
  func.func @transform_6(%arg0: i32) -> (i32, i32) {
    %c0_i32 = arith.constant 0 : i32
    %c0_i32_0 = arith.constant 0 : i32
    %c0_i32_1 = arith.constant 0 : i32
    return %c0_i32, %c0_i32_0 : i32, i32
  }
  func.func @transform_7(%arg0: i32) -> (i32, i32) {
    %c0_i32 = arith.constant 0 : i32
    %c0_i32_0 = arith.constant 0 : i32
    %c0_i32_1 = arith.constant 0 : i32
    return %c0_i32, %c0_i32_0 : i32, i32
  }
  func.func @transform_8(%arg0: i32) -> (i32, i32) {
    %c0_i32 = arith.constant 0 : i32
    %c0_i32_0 = arith.constant 0 : i32
    %c0_i32_1 = arith.constant 0 : i32
    return %c0_i32, %c0_i32_0 : i32, i32
  }
  func.func @transform_9(%arg0: i32) -> (i32, i32) {
    %c0_i32 = arith.constant 0 : i32
    %c0_i32_0 = arith.constant 0 : i32
    return %arg0, %c0_i32 : i32, i32
  }
}

module attributes {stable_mosaic.version = 11 : i64} {
  func.func @kernel(%arg0: i32, %arg1: memref<16x128xf32, #tpu.memory_space<vmem>>, %arg2: memref<1x128xf32, #tpu.memory_space<vmem>>, %arg3: memref<1x128xf32, #tpu.memory_space<vmem>>, %arg4: memref<128x128xf32, #tpu.memory_space<vmem>>, %arg5: memref<1x128xf32, #tpu.memory_space<vmem>>, %arg6: memref<1x128xf32, #tpu.memory_space<vmem>>, %arg7: memref<1x128xf32, #tpu.memory_space<vmem>>, %arg8: memref<128x128xf32, #tpu.memory_space<vmem>>, %arg9: memref<1x128xf32, #tpu.memory_space<vmem>>, %arg10: memref<16x128xf32, #tpu.memory_space<vmem>>) attributes {dimension_semantics = [#tpu.dimension_semantics<parallel>], iteration_bounds = array<i64: 1>, scalar_prefetch = 0 : i64, scratch_operands = 0 : i64, tpu.core_type = #tpu.core_type<tc>, window_params = [{transform_indices = @transform_0, window_bounds = array<i64: 16, 128>}, {pipeline_mode = #tpu.pipeline_mode<synchronous>, transform_indices = @transform_1, window_bounds = array<i64: 1, 128>}, {pipeline_mode = #tpu.pipeline_mode<synchronous>, transform_indices = @transform_2, window_bounds = array<i64: 1, 128>}, {pipeline_mode = #tpu.pipeline_mode<synchronous>, transform_indices = @transform_3, window_bounds = array<i64: 128, 128>}, {pipeline_mode = #tpu.pipeline_mode<synchronous>, transform_indices = @transform_4, window_bounds = array<i64: 1, 128>}, {pipeline_mode = #tpu.pipeline_mode<synchronous>, transform_indices = @transform_5, window_bounds = array<i64: 1, 128>}, {pipeline_mode = #tpu.pipeline_mode<synchronous>, transform_indices = @transform_6, window_bounds = array<i64: 1, 128>}, {pipeline_mode = #tpu.pipeline_mode<synchronous>, transform_indices = @transform_7, window_bounds = array<i64: 128, 128>}, {pipeline_mode = #tpu.pipeline_mode<synchronous>, transform_indices = @transform_8, window_bounds = array<i64: 1, 128>}, {transform_indices = @transform_9, window_bounds = array<i64: 16, 128>}]} {
    %c0 = arith.constant 0 : index
    %c0_0 = arith.constant 0 : index
    %0 = vector.load %arg1[%c0, %c0_0] : memref<16x128xf32, #tpu.memory_space<vmem>>, vector<16x128xf32>
    %cst = arith.constant dense<0.000000e+00> : vector<16xf32>
    %1 = vector.multi_reduction <add>, %0, %cst [1] : vector<16x128xf32> to vector<16xf32>
    %2 = vector.shape_cast %1 : vector<16xf32> to vector<16x1xf32>
    %3 = arith.mulf %0, %0 : vector<16x128xf32>
    %cst_1 = arith.constant dense<0.000000e+00> : vector<16xf32>
    %4 = vector.multi_reduction <add>, %3, %cst_1 [1] : vector<16x128xf32> to vector<16xf32>
    %5 = vector.shape_cast %4 : vector<16xf32> to vector<16x1xf32>
    %cst_2 = arith.constant 3.125000e-02 : f32
    %6 = vector.broadcast %cst_2 : f32 to vector<16x1xf32>
    %7 = arith.mulf %2, %6 : vector<16x1xf32>
    %cst_3 = arith.constant 3.125000e-02 : f32
    %8 = vector.broadcast %cst_3 : f32 to vector<16x1xf32>
    %9 = arith.mulf %5, %8 : vector<16x1xf32>
    %10 = arith.mulf %7, %7 : vector<16x1xf32>
    %11 = arith.subf %9, %10 : vector<16x1xf32>
    %cst_4 = arith.constant 0.000000e+00 : f32
    %12 = vector.broadcast %cst_4 : f32 to vector<16x1xf32>
    %13 = arith.maximumf %11, %12 : vector<16x1xf32>
    %14 = vector.broadcast %7 : vector<16x1xf32> to vector<16x128xf32>
    %15 = arith.subf %0, %14 : vector<16x128xf32>
    %cst_5 = arith.constant 9.99999974E-6 : f32
    %16 = vector.broadcast %cst_5 : f32 to vector<16x1xf32>
    %17 = arith.addf %13, %16 : vector<16x1xf32>
    %18 = math.rsqrt %17 : vector<16x1xf32>
    %19 = vector.broadcast %18 : vector<16x1xf32> to vector<16x128xf32>
    %20 = arith.mulf %15, %19 : vector<16x128xf32>
    %c0_6 = arith.constant 0 : index
    %c0_7 = arith.constant 0 : index
    %21 = vector.load %arg2[%c0_6, %c0_7] : memref<1x128xf32, #tpu.memory_space<vmem>>, vector<1x128xf32>
    %22 = vector.broadcast %21 : vector<1x128xf32> to vector<16x128xf32>
    %23 = arith.mulf %20, %22 : vector<16x128xf32>
    %c0_8 = arith.constant 0 : index
    %c0_9 = arith.constant 0 : index
    %24 = vector.load %arg3[%c0_8, %c0_9] : memref<1x128xf32, #tpu.memory_space<vmem>>, vector<1x128xf32>
    %25 = vector.broadcast %24 : vector<1x128xf32> to vector<16x128xf32>
    %26 = arith.addf %23, %25 : vector<16x128xf32>
    %c0_10 = arith.constant 0 : index
    %c0_11 = arith.constant 0 : index
    %27 = vector.load %arg4[%c0_10, %c0_11] : memref<128x128xf32, #tpu.memory_space<vmem>>, vector<128x128xf32>
    %cst_12 = arith.constant dense<0.000000e+00> : vector<16x128xf32>
    %28 = tpu.matmul %26, %27, %cst_12 {dimension_numbers = #tpu.dot_dimension_numbers<[1], [0], [0], [1], [0, 0, 1, 1], [], []>} : vector<16x128xf32>, vector<128x128xf32>, vector<16x128xf32> -> vector<16x128xf32>
    %c0_13 = arith.constant 0 : index
    %c0_14 = arith.constant 0 : index
    %29 = vector.load %arg5[%c0_13, %c0_14] : memref<1x128xf32, #tpu.memory_space<vmem>>, vector<1x128xf32>
    %30 = vector.broadcast %29 : vector<1x128xf32> to vector<16x128xf32>
    %31 = arith.addf %28, %30 : vector<16x128xf32>
    %cst_15 = arith.constant 5.000000e-01 : f32
    %32 = vector.broadcast %cst_15 : f32 to vector<16x128xf32>
    %33 = arith.mulf %32, %31 : vector<16x128xf32>
    %cst_16 = arith.constant 0.707106769 : f32
    %34 = vector.broadcast %cst_16 : f32 to vector<16x128xf32>
    %35 = arith.mulf %31, %34 : vector<16x128xf32>
    %36 = math.erf %35 : vector<16x128xf32>
    %cst_17 = arith.constant 1.000000e+00 : f32
    %37 = vector.broadcast %cst_17 : f32 to vector<16x128xf32>
    %38 = arith.addf %37, %36 : vector<16x128xf32>
    %39 = arith.mulf %33, %38 : vector<16x128xf32>
    %cst_18 = arith.constant dense<0.000000e+00> : vector<16xf32>
    %40 = vector.multi_reduction <add>, %39, %cst_18 [1] : vector<16x128xf32> to vector<16xf32>
    %41 = vector.shape_cast %40 : vector<16xf32> to vector<16x1xf32>
    %42 = arith.mulf %39, %39 : vector<16x128xf32>
    %cst_19 = arith.constant dense<0.000000e+00> : vector<16xf32>
    %43 = vector.multi_reduction <add>, %42, %cst_19 [1] : vector<16x128xf32> to vector<16xf32>
    %44 = vector.shape_cast %43 : vector<16xf32> to vector<16x1xf32>
    %cst_20 = arith.constant 1.562500e-02 : f32
    %45 = vector.broadcast %cst_20 : f32 to vector<16x1xf32>
    %46 = arith.mulf %41, %45 : vector<16x1xf32>
    %cst_21 = arith.constant 1.562500e-02 : f32
    %47 = vector.broadcast %cst_21 : f32 to vector<16x1xf32>
    %48 = arith.mulf %44, %47 : vector<16x1xf32>
    %49 = arith.mulf %46, %46 : vector<16x1xf32>
    %50 = arith.subf %48, %49 : vector<16x1xf32>
    %cst_22 = arith.constant 0.000000e+00 : f32
    %51 = vector.broadcast %cst_22 : f32 to vector<16x1xf32>
    %52 = arith.maximumf %50, %51 : vector<16x1xf32>
    %53 = vector.broadcast %46 : vector<16x1xf32> to vector<16x128xf32>
    %54 = arith.subf %39, %53 : vector<16x128xf32>
    %cst_23 = arith.constant 9.99999974E-6 : f32
    %55 = vector.broadcast %cst_23 : f32 to vector<16x1xf32>
    %56 = arith.addf %52, %55 : vector<16x1xf32>
    %57 = math.rsqrt %56 : vector<16x1xf32>
    %58 = vector.broadcast %57 : vector<16x1xf32> to vector<16x128xf32>
    %59 = arith.mulf %54, %58 : vector<16x128xf32>
    %c0_24 = arith.constant 0 : index
    %c0_25 = arith.constant 0 : index
    %60 = vector.load %arg6[%c0_24, %c0_25] : memref<1x128xf32, #tpu.memory_space<vmem>>, vector<1x128xf32>
    %61 = vector.broadcast %60 : vector<1x128xf32> to vector<16x128xf32>
    %62 = arith.mulf %59, %61 : vector<16x128xf32>
    %c0_26 = arith.constant 0 : index
    %c0_27 = arith.constant 0 : index
    %63 = vector.load %arg7[%c0_26, %c0_27] : memref<1x128xf32, #tpu.memory_space<vmem>>, vector<1x128xf32>
    %64 = vector.broadcast %63 : vector<1x128xf32> to vector<16x128xf32>
    %65 = arith.addf %62, %64 : vector<16x128xf32>
    %c0_28 = arith.constant 0 : index
    %c0_29 = arith.constant 0 : index
    %66 = vector.load %arg8[%c0_28, %c0_29] : memref<128x128xf32, #tpu.memory_space<vmem>>, vector<128x128xf32>
    %cst_30 = arith.constant dense<0.000000e+00> : vector<16x128xf32>
    %67 = tpu.matmul %65, %66, %cst_30 {dimension_numbers = #tpu.dot_dimension_numbers<[1], [0], [0], [1], [0, 0, 1, 1], [], []>} : vector<16x128xf32>, vector<128x128xf32>, vector<16x128xf32> -> vector<16x128xf32>
    %c0_31 = arith.constant 0 : index
    %c0_32 = arith.constant 0 : index
    %68 = vector.load %arg9[%c0_31, %c0_32] : memref<1x128xf32, #tpu.memory_space<vmem>>, vector<1x128xf32>
    %69 = vector.broadcast %68 : vector<1x128xf32> to vector<16x128xf32>
    %70 = arith.addf %67, %69 : vector<16x128xf32>
    %c0_33 = arith.constant 0 : index
    %c0_34 = arith.constant 0 : index
    %71 = vector.load %arg10[%c0_33, %c0_34] : memref<16x128xf32, #tpu.memory_space<vmem>>, vector<16x128xf32>
    tpu.vector_store %arg10[%c0_33, %c0_34], %70 {strides = array<i32>} : memref<16x128xf32, #tpu.memory_space<vmem>>, vector<16x128xf32>,
    return
  }
  func.func @transform_0(%arg0: i32) -> (i32, i32) {
    %c0_i32 = arith.constant 0 : i32
    %c0_i32_0 = arith.constant 0 : i32
    return %arg0, %c0_i32 : i32, i32
  }
  func.func @transform_1(%arg0: i32) -> (i32, i32) {
    %c0_i32 = arith.constant 0 : i32
    %c0_i32_0 = arith.constant 0 : i32
    %c0_i32_1 = arith.constant 0 : i32
    return %c0_i32, %c0_i32_0 : i32, i32
  }
  func.func @transform_2(%arg0: i32) -> (i32, i32) {
    %c0_i32 = arith.constant 0 : i32
    %c0_i32_0 = arith.constant 0 : i32
    %c0_i32_1 = arith.constant 0 : i32
    return %c0_i32, %c0_i32_0 : i32, i32
  }
  func.func @transform_3(%arg0: i32) -> (i32, i32) {
    %c0_i32 = arith.constant 0 : i32
    %c0_i32_0 = arith.constant 0 : i32
    %c0_i32_1 = arith.constant 0 : i32
    return %c0_i32, %c0_i32_0 : i32, i32
  }
  func.func @transform_4(%arg0: i32) -> (i32, i32) {
    %c0_i32 = arith.constant 0 : i32
    %c0_i32_0 = arith.constant 0 : i32
    %c0_i32_1 = arith.constant 0 : i32
    return %c0_i32, %c0_i32_0 : i32, i32
  }
  func.func @transform_5(%arg0: i32) -> (i32, i32) {
    %c0_i32 = arith.constant 0 : i32
    %c0_i32_0 = arith.constant 0 : i32
    %c0_i32_1 = arith.constant 0 : i32
    return %c0_i32, %c0_i32_0 : i32, i32
  }
  func.func @transform_6(%arg0: i32) -> (i32, i32) {
    %c0_i32 = arith.constant 0 : i32
    %c0_i32_0 = arith.constant 0 : i32
    %c0_i32_1 = arith.constant 0 : i32
    return %c0_i32, %c0_i32_0 : i32, i32
  }
  func.func @transform_7(%arg0: i32) -> (i32, i32) {
    %c0_i32 = arith.constant 0 : i32
    %c0_i32_0 = arith.constant 0 : i32
    %c0_i32_1 = arith.constant 0 : i32
    return %c0_i32, %c0_i32_0 : i32, i32
  }
  func.func @transform_8(%arg0: i32) -> (i32, i32) {
    %c0_i32 = arith.constant 0 : i32
    %c0_i32_0 = arith.constant 0 : i32
    %c0_i32_1 = arith.constant 0 : i32
    return %c0_i32, %c0_i32_0 : i32, i32
  }
  func.func @transform_9(%arg0: i32) -> (i32, i32) {
    %c0_i32 = arith.constant 0 : i32
    %c0_i32_0 = arith.constant 0 : i32
    return %arg0, %c0_i32 : i32, i32
  }
}

</mosaic_0001>

<llo_original>
// kernel: tpu_custom_call.1
$region0: #{tpu_custom_call.1}
  #allocation0 [shape = 'u32[]', space=smem, size = 0x4, offset = 0x4, fixed_abs, tag = 'smem constant byte address 0x4 - core index']
  #allocation1 [shape = 'u32[144,128]{1,0:T(1,128)}', space=vmem, size = 0x12000, scoped, tag = 'internal scratch']
  %s0 = inlined_call_operand.hbm [shape: f32[16,128], index: 0, kind: input, shape index: {}]
  %s1 = inlined_call_operand.vmem [shape: f32[1,128], index: 1, kind: input, shape index: {}]
  %s2 = inlined_call_operand.vmem [shape: f32[1,128], index: 2, kind: input, shape index: {}]
  %s3 = inlined_call_operand.hbm [shape: f32[128,128], index: 3, kind: input, shape index: {}]
  %s4 = inlined_call_operand.vmem [shape: f32[1,128], index: 4, kind: input, shape index: {}]
  %s5 = inlined_call_operand.vmem [shape: f32[1,128], index: 5, kind: input, shape index: {}]
  %s6 = inlined_call_operand.vmem [shape: f32[1,128], index: 6, kind: input, shape index: {}]
  %s7 = inlined_call_operand.hbm [shape: f32[128,128], index: 7, kind: input, shape index: {}]
  %s8 = inlined_call_operand.vmem [shape: f32[1,128], index: 8, kind: input, shape index: {}]
  %s9 = inlined_call_operand.hbm [shape: f32[16,128], index: 9, kind: output, shape index: {}]
  %s10 = sld [smem:[#allocation0]]
  $region58: #{tpu_custom_call.1} parent=0
    _
  %s12 = ssub.s32 1, %s10
  %s13 = scalar_select 0, %s12, %s10
  $region1: #{tpu_custom_call.1} parent=0
    #allocation2 [shape = 'u8[8192]{0}', space=vmem, size = 0x2000, scoped, tag = 'input window, operand 0, single buffered']
    #allocation3 [shape = 's32[1]{0}', space=sflag, size = 0x4, scoped, tag = 'scoped memory for tpu_custom_call.1']
    #allocation4 [shape = 's32[1]{0}', space=sflag, size = 0x4, scoped, tag = 'scoped memory for tpu_custom_call.1']
    #allocation5 [shape = 'u8[65536]{0}', space=vmem, size = 0x10000, scoped, tag = 'input window, operand 3, single buffered']
    #allocation6 [shape = 's32[1]{0}', space=sflag, size = 0x4, scoped, tag = 'scoped memory for tpu_custom_call.1']
    #allocation7 [shape = 'u8[65536]{0}', space=vmem, size = 0x10000, scoped, tag = 'input window, operand 7, single buffered']
    #allocation8 [shape = 'u8[8192]{0}', space=vmem, size = 0x2000, scoped, tag = 'output window, operand 0, single buffered']
    %14 = vsyncpa [#allocation3], 0
    %15 = vsyncpa [#allocation6], 0
    %16 = vsyncpa [#allocation4], 0
    // Predicated region
    $region2: #{tpu_custom_call.1} parent=1 // pred_check
      _
    $region3: #{tpu_custom_call.1} parent=1 // pred_check_branch
      %18 = sbr.rel (0) target = $region5
    $region4: #{tpu_custom_call.1} parent=1 // pred_region
      %s20 = ssub.s32 256, 256
      %21 = vsyncadd [#allocation3], %s20
      %s22 = sshll.u32 [#allocation2], 4
      %s23 = int_to_ptr.vmem [resolvable:$true] %s22
      %28 = dma.hbm_to_vmem [thread:$0]  %s0, 256, %s23, [#allocation3], 128, 128, 8
    $region5: #{tpu_custom_call.1} parent=1 // pred_fallthru
      _
    // Predicated region
    $region6: #{tpu_custom_call.1} parent=1 // pred_check
      _
    $region7: #{tpu_custom_call.1} parent=1 // pred_check_branch
      %30 = sbr.rel (0) target = $region9
    $region8: #{tpu_custom_call.1} parent=1 // pred_region
      _
    $region9: #{tpu_custom_call.1} parent=1 // pred_fallthru
      _
    // Predicated region
    $region10: #{tpu_custom_call.1} parent=1 // pred_check
      _
    $region11: #{tpu_custom_call.1} parent=1 // pred_check_branch
      %32 = sbr.rel (0) target = $region13
    $region12: #{tpu_custom_call.1} parent=1 // pred_region
      _
    $region13: #{tpu_custom_call.1} parent=1 // pred_fallthru
      _
    // Predicated region
    $region14: #{tpu_custom_call.1} parent=1 // pred_check
      _
    $region15: #{tpu_custom_call.1} parent=1 // pred_check_branch
      %34 = sbr.rel (0) target = $region17
    $region16: #{tpu_custom_call.1} parent=1 // pred_region
      %s36 = ssub.s32 2048, 2048
      %37 = vsyncadd [#allocation6], %s36
      %s38 = sshll.u32 [#allocation5], 4
      %s39 = int_to_ptr.vmem [resolvable:$true] %s38
      %44 = dma.hbm_to_vmem [thread:$0]  %s3, 2048, %s39, [#allocation6], 128, 128, 8
    $region17: #{tpu_custom_call.1} parent=1 // pred_fallthru
      _
    // Predicated region
    $region18: #{tpu_custom_call.1} parent=1 // pred_check
      _
    $region19: #{tpu_custom_call.1} parent=1 // pred_check_branch
      %46 = sbr.rel (0) target = $region21
    $region20: #{tpu_custom_call.1} parent=1 // pred_region
      _
    $region21: #{tpu_custom_call.1} parent=1 // pred_fallthru
      _
    // Predicated region
    $region22: #{tpu_custom_call.1} parent=1 // pred_check
      _
    $region23: #{tpu_custom_call.1} parent=1 // pred_check_branch
      %48 = sbr.rel (0) target = $region25
    $region24: #{tpu_custom_call.1} parent=1 // pred_region
      _
    $region25: #{tpu_custom_call.1} parent=1 // pred_fallthru
      _
    // Predicated region
    $region26: #{tpu_custom_call.1} parent=1 // pred_check
      _
    $region27: #{tpu_custom_call.1} parent=1 // pred_check_branch
      %50 = sbr.rel (0) target = $region29
    $region28: #{tpu_custom_call.1} parent=1 // pred_region
      _
    $region29: #{tpu_custom_call.1} parent=1 // pred_fallthru
      _
    // Predicated region
    $region30: #{tpu_custom_call.1} parent=1 // pred_check
      _
    $region31: #{tpu_custom_call.1} parent=1 // pred_check_branch
      %52 = sbr.rel (0) target = $region33
    $region32: #{tpu_custom_call.1} parent=1 // pred_region
      %s54 = ssub.s32 2048, 2048
      %55 = vsyncadd [#allocation6], %s54
      %s56 = sshll.u32 [#allocation7], 4
      %s57 = int_to_ptr.vmem [resolvable:$true] %s56
      %62 = dma.hbm_to_vmem [thread:$0]  %s7, 2048, %s57, [#allocation6], 128, 128, 8
    $region33: #{tpu_custom_call.1} parent=1 // pred_fallthru
      _
    // Predicated region
    $region34: #{tpu_custom_call.1} parent=1 // pred_check
      _
    $region35: #{tpu_custom_call.1} parent=1 // pred_check_branch
      %64 = sbr.rel (0) target = $region37
    $region36: #{tpu_custom_call.1} parent=1 // pred_region
      _
    $region37: #{tpu_custom_call.1} parent=1 // pred_fallthru
      _
    // Predicated region
    $region38: #{tpu_custom_call.1} parent=1 // pred_check
      _
    $region39: #{tpu_custom_call.1} parent=1 // pred_check_branch
      %66 = sbr.rel (0) target = $region41
    $region40: #{tpu_custom_call.1} parent=1 // pred_region
      %67 = dma.done [#allocation3], 256
    $region41: #{tpu_custom_call.1} parent=1 // pred_fallthru
      _
    // Predicated region
    $region42: #{tpu_custom_call.1} parent=1 // pred_check
      _
    $region43: #{tpu_custom_call.1} parent=1 // pred_check_branch
      %69 = sbr.rel (0) target = $region45
    $region44: #{tpu_custom_call.1} parent=1 // pred_region
      %70 = dma.done [#allocation6], 2048
    $region45: #{tpu_custom_call.1} parent=1 // pred_fallthru
      _
    // Predicated region
    $region46: #{tpu_custom_call.1} parent=1 // pred_check
      _
    $region47: #{tpu_custom_call.1} parent=1 // pred_check_branch
      %72 = sbr.rel (0) target = $region49
    $region48: #{tpu_custom_call.1} parent=1 // pred_region
      %73 = dma.done [#allocation6], 2048
    $region49: #{tpu_custom_call.1} parent=1 // pred_fallthru
      _
    %v74 = vld [vmem:[#allocation2] sm:$0xff]
    %v75 = vld [vmem:[#allocation2 + $0x8] sm:$0xff]
    %76 = vadd.xlane.f32.xlu0 %v74
    %v77 = vpop.xlane.xlu0 %76
    %78 = vadd.xlane.f32.xlu0 %v75
    %v79 = vpop.xlane.xlu0 %78
    %v80 = vmul.f32 %v74, %v74
    %v81 = vmul.f32 %v75, %v75
    %82 = vadd.xlane.f32.xlu0 %v80
    %v83 = vpop.xlane.xlu0 %82
    %84 = vadd.xlane.f32.xlu0 %v81
    %v85 = vpop.xlane.xlu0 %84
    %v86 = vmul.f32 %v77, 0.03125
    %v87 = vmul.f32 %v79, 0.03125
    %v88 = vmul.f32 %v83, 0.03125
    %v89 = vmul.f32 %v85, 0.03125
    %v90 = vmul.f32 %v86, %v86
    %v91 = vmul.f32 %v87, %v87
    %v92 = vsub.f32 %v88, %v90
    %v93 = vsub.f32 %v89, %v91
    %v94 = vmax.f32 %v92, 0.0
    %v95 = vmax.f32 %v93, 0.0
    %v96 = vsub.f32 %v74, %v86
    %v97 = vsub.f32 %v75, %v87
    %v98 = vadd.f32 %v94, 1e-05
    %v99 = vadd.f32 %v95, 1e-05
    %v100 = vrsqrt.pop %v98
    %v101 = vrsqrt.pop %v99
    %v102 = vmul.f32 %v96, %v100
    %v103 = vmul.f32 %v97, %v101
    %v104 = vld [vmem:[%s1] sm:$0x1]
    %v106 = vlaneseq
    %v107 = vshrl.u32 %v106, 7
    %v108 = vsub.s32 0, %v107
    %v109 = vrot.slane %v104, %v108
    %v111 = vmul.f32 %v102, %v109
    %v112 = vmul.f32 %v103, %v109
    %v113 = vld [vmem:[%s2] sm:$0x1]
    %v115 = vlaneseq
    %v116 = vshrl.u32 %v115, 7
    %v117 = vsub.s32 0, %v116
    %v118 = vrot.slane %v113, %v117
    %v120 = vadd.f32 %v111, %v118
    %v121 = vadd.f32 %v112, %v118
    %v122 = vld [vmem:[#allocation5] sm:$0xff]
    %v123 = vld [vmem:[#allocation5 + $0x8] sm:$0xff]
    %v124 = vld [vmem:[#allocation5 + $0x10] sm:$0xff]
    %v125 = vld [vmem:[#allocation5 + $0x18] sm:$0xff]
    %v126 = vld [vmem:[#allocation5 + $0x20] sm:$0xff]
    %v127 = vld [vmem:[#allocation5 + $0x28] sm:$0xff]
    %v128 = vld [vmem:[#allocation5 + $0x30] sm:$0xff]
    %v129 = vld [vmem:[#allocation5 + $0x38] sm:$0xff]
    %v130 = vld [vmem:[#allocation5 + $0x40] sm:$0xff]
    %v131 = vld [vmem:[#allocation5 + $0x48] sm:$0xff]
    %v132 = vld [vmem:[#allocation5 + $0x50] sm:$0xff]
    %v133 = vld [vmem:[#allocation5 + $0x58] sm:$0xff]
    %v134 = vld [vmem:[#allocation5 + $0x60] sm:$0xff]
    %v135 = vld [vmem:[#allocation5 + $0x68] sm:$0xff]
    %v136 = vld [vmem:[#allocation5 + $0x70] sm:$0xff]
    %v137 = vld [vmem:[#allocation5 + $0x78] sm:$0xff]
    %v138 = vld [vmem:[%s4] sm:$0x1]
    %v140 = vlaneseq
    %v141 = vshrl.u32 %v140, 7
    %v142 = vsub.s32 0, %v141
    %v143 = vrot.slane %v138, %v142
    %145 = vmatprep.subr.mxu0 0.0
    %146 = vmatpush1.msra.mxu0 %v122
    %147 = vmatprep.subr.mxu0 0.0
    %148 = vmatpush1.msra.mxu0 %v123
    %149 = vmatprep.subr.mxu0 0.0
    %150 = vmatpush1.msra.mxu0 %v124
    %151 = vmatprep.subr.mxu0 0.0
    %152 = vmatpush1.msra.mxu0 %v125
    %153 = vmatprep.subr.mxu0 0.0
    %154 = vmatpush1.msra.mxu0 %v126
    %155 = vmatprep.subr.mxu0 0.0
    %156 = vmatpush1.msra.mxu0 %v127
    %157 = vmatprep.subr.mxu0 0.0
    %158 = vmatpush1.msra.mxu0 %v128
    %159 = vmatprep.subr.mxu0 0.0
    %160 = vmatpush1.msra.mxu0 %v129
    %161 = vmatprep.subr.mxu0 0.0
    %162 = vmatpush1.msra.mxu0 %v130
    %163 = vmatprep.subr.mxu0 0.0
    %164 = vmatpush1.msra.mxu0 %v131
    %165 = vmatprep.subr.mxu0 0.0
    %166 = vmatpush1.msra.mxu0 %v132
    %167 = vmatprep.subr.mxu0 0.0
    %168 = vmatpush1.msra.mxu0 %v133
    %169 = vmatprep.subr.mxu0 0.0
    %170 = vmatpush1.msra.mxu0 %v134
    %171 = vmatprep.subr.mxu0 0.0
    %172 = vmatpush1.msra.mxu0 %v135
    %173 = vmatprep.subr.mxu0 0.0
    %174 = vmatpush1.msra.mxu0 %v136
    %175 = vmatprep.subr.mxu0 0.0
    %176 = vmatpush1.msra.mxu0 %v137
    %177 = vmatprep.subr.mxu0 0.0
    %178 = vmatpush1.msra.mxu0 0.0
    %179 = vmatprep.subr.mxu0 0.0
    %180 = vmatpush1.msra.mxu0 0.0
    %181 = vmatprep.subr.mxu0 0.0
    %182 = vmatpush1.msra.mxu0 0.0
    %183 = vmatprep.subr.mxu0 0.0
    %184 = vmatpush1.msra.mxu0 0.0
    %185 = vmatprep.subr.mxu0 0.0
    %186 = vmatpush1.msra.mxu0 0.0
    %187 = vmatprep.subr.mxu0 0.0
    %188 = vmatpush1.msra.mxu0 0.0
    %189 = vmatprep.subr.mxu0 0.0
    %190 = vmatpush1.msra.mxu0 0.0
    %191 = vmatprep.subr.mxu0 0.0
    %192 = vmatpush1.msra.mxu0 0.0
    %193 = vmatprep.subr.mxu0 0.0
    %194 = vmatpush1.msra.mxu0 0.0
    %195 = vmatprep.subr.mxu0 0.0
    %196 = vmatpush1.msra.mxu0 0.0
    %197 = vmatprep.subr.mxu0 0.0
    %198 = vmatpush1.msra.mxu0 0.0
    %199 = vmatprep.subr.mxu0 0.0
    %200 = vmatpush1.msra.mxu0 0.0
    %201 = vmatprep.subr.mxu0 0.0
    %202 = vmatpush1.msra.mxu0 0.0
    %203 = vmatprep.subr.mxu0 0.0
    %204 = vmatpush1.msra.mxu0 0.0
    %205 = vmatprep.subr.mxu0 0.0
    %206 = vmatpush1.msra.mxu0 0.0
    %207 = vmatprep.subr.mxu0 0.0
    %208 = vmatpush1.msra.mxu0 0.0
    %209 = vmatprep.mubr.f32.mxu0 0.0
    %210 = vmatmul.mubr.f32.gmra.mrb[0].mxu0 %v120
    %v211 = vpop.f32.mrb[0].mxu0
    %v212 = vadd.f32 %v143, %v211
    %v213 = vpop.f32.mrb[0].mxu0
    %214 = vmatprep.mubr.f32.mxu0 0.0
    %215 = vmatmul.mubr.f32.gmra.mrb[0].mxu0 %v121
    %v216 = vpop.f32.mrb[0].mxu0
    %v217 = vadd.f32 %v143, %v216
    %v218 = vpop.f32.mrb[0].mxu0
    %219 = vdwg.mxu0
    %v220 = vmul.f32 %v212, 0.5
    %v221 = vmul.f32 %v217, 0.5
    %v222 = vmul.f32 %v212, 0.70710677
    %v223 = vmul.f32 %v217, 0.70710677
    %v224 = verf.f32.pop %v222
    %v225 = verf.f32.pop %v223
    %v226 = vadd.f32 %v224, 1.0
    %v227 = vadd.f32 %v225, 1.0
    %v228 = vmul.f32 %v220, %v226
    %v229 = vmul.f32 %v221, %v227
    %230 = vadd.xlane.f32.xlu0 %v228
    %v231 = vpop.xlane.xlu0 %230
    %232 = vadd.xlane.f32.xlu0 %v229
    %v233 = vpop.xlane.xlu0 %232
    %v234 = vmul.f32 %v228, %v228
    %v235 = vmul.f32 %v229, %v229
    %236 = vadd.xlane.f32.xlu0 %v234
    %v237 = vpop.xlane.xlu0 %236
    %238 = vadd.xlane.f32.xlu0 %v235
    %v239 = vpop.xlane.xlu0 %238
    %v240 = vmul.f32 %v231, 0.015625
    %v241 = vmul.f32 %v233, 0.015625
    %v242 = vmul.f32 %v237, 0.015625
    %v243 = vmul.f32 %v239, 0.015625
    %v244 = vmul.f32 %v240, %v240
    %v245 = vmul.f32 %v241, %v241
    %v246 = vsub.f32 %v242, %v244
    %v247 = vsub.f32 %v243, %v245
    %v248 = vmax.f32 %v246, 0.0
    %v249 = vmax.f32 %v247, 0.0
    %v250 = vsub.f32 %v228, %v240
    %v251 = vsub.f32 %v229, %v241
    %v252 = vadd.f32 %v248, 1e-05
    %v253 = vadd.f32 %v249, 1e-05
    %v254 = vrsqrt.pop %v252
    %v255 = vrsqrt.pop %v253
    %v256 = vmul.f32 %v250, %v254
    %v257 = vmul.f32 %v251, %v255
    %v258 = vld [vmem:[%s5] sm:$0x1]
    %v260 = vlaneseq
    %v261 = vshrl.u32 %v260, 7
    %v262 = vsub.s32 0, %v261
    %v263 = vrot.slane %v258, %v262
    %v265 = vmul.f32 %v256, %v263
    %v266 = vmul.f32 %v257, %v263
    %v267 = vld [vmem:[%s6] sm:$0x1]
    %v269 = vlaneseq
    %v270 = vshrl.u32 %v269, 7
    %v271 = vsub.s32 0, %v270
    %v272 = vrot.slane %v267, %v271
    %v274 = vadd.f32 %v265, %v272
    %v275 = vadd.f32 %v266, %v272
    %v276 = vld [vmem:[#allocation7] sm:$0xff]
    %v277 = vld [vmem:[#allocation7 + $0x8] sm:$0xff]
    %v278 = vld [vmem:[#allocation7 + $0x10] sm:$0xff]
    %v279 = vld [vmem:[#allocation7 + $0x18] sm:$0xff]
    %v280 = vld [vmem:[#allocation7 + $0x20] sm:$0xff]
    %v281 = vld [vmem:[#allocation7 + $0x28] sm:$0xff]
    %v282 = vld [vmem:[#allocation7 + $0x30] sm:$0xff]
    %v283 = vld [vmem:[#allocation7 + $0x38] sm:$0xff]
    %v284 = vld [vmem:[#allocation7 + $0x40] sm:$0xff]
    %v285 = vld [vmem:[#allocation7 + $0x48] sm:$0xff]
    %v286 = vld [vmem:[#allocation7 + $0x50] sm:$0xff]
    %v287 = vld [vmem:[#allocation7 + $0x58] sm:$0xff]
    %v288 = vld [vmem:[#allocation7 + $0x60] sm:$0xff]
    %v289 = vld [vmem:[#allocation7 + $0x68] sm:$0xff]
    %v290 = vld [vmem:[#allocation7 + $0x70] sm:$0xff]
    %v291 = vld [vmem:[#allocation7 + $0x78] sm:$0xff]
    %v292 = vld [vmem:[%s8] sm:$0x1]
    %v294 = vlaneseq
    %v295 = vshrl.u32 %v294, 7
    %v296 = vsub.s32 0, %v295
    %v297 = vrot.slane %v292, %v296
    %299 = vmatprep.subr.mxu0 0.0
    %300 = vmatpush1.msra.mxu0 %v276
    %301 = vmatprep.subr.mxu0 0.0
    %302 = vmatpush1.msra.mxu0 %v277
    %303 = vmatprep.subr.mxu0 0.0
    %304 = vmatpush1.msra.mxu0 %v278
    %305 = vmatprep.subr.mxu0 0.0
    %306 = vmatpush1.msra.mxu0 %v279
    %307 = vmatprep.subr.mxu0 0.0
    %308 = vmatpush1.msra.mxu0 %v280
    %309 = vmatprep.subr.mxu0 0.0
    %310 = vmatpush1.msra.mxu0 %v281
    %311 = vmatprep.subr.mxu0 0.0
    %312 = vmatpush1.msra.mxu0 %v282
    %313 = vmatprep.subr.mxu0 0.0
    %314 = vmatpush1.msra.mxu0 %v283
    %315 = vmatprep.subr.mxu0 0.0
    %316 = vmatpush1.msra.mxu0 %v284
    %317 = vmatprep.subr.mxu0 0.0
    %318 = vmatpush1.msra.mxu0 %v285
    %319 = vmatprep.subr.mxu0 0.0
    %320 = vmatpush1.msra.mxu0 %v286
    %321 = vmatprep.subr.mxu0 0.0
    %322 = vmatpush1.msra.mxu0 %v287
    %323 = vmatprep.subr.mxu0 0.0
    %324 = vmatpush1.msra.mxu0 %v288
    %325 = vmatprep.subr.mxu0 0.0
    %326 = vmatpush1.msra.mxu0 %v289
    %327 = vmatprep.subr.mxu0 0.0
    %328 = vmatpush1.msra.mxu0 %v290
    %329 = vmatprep.subr.mxu0 0.0
    %330 = vmatpush1.msra.mxu0 %v291
    %331 = vmatprep.subr.mxu0 0.0
    %332 = vmatpush1.msra.mxu0 0.0
    %333 = vmatprep.subr.mxu0 0.0
    %334 = vmatpush1.msra.mxu0 0.0
    %335 = vmatprep.subr.mxu0 0.0
    %336 = vmatpush1.msra.mxu0 0.0
    %337 = vmatprep.subr.mxu0 0.0
    %338 = vmatpush1.msra.mxu0 0.0
    %339 = vmatprep.subr.mxu0 0.0
    %340 = vmatpush1.msra.mxu0 0.0
    %341 = vmatprep.subr.mxu0 0.0
    %342 = vmatpush1.msra.mxu0 0.0
    %343 = vmatprep.subr.mxu0 0.0
    %344 = vmatpush1.msra.mxu0 0.0
    %345 = vmatprep.subr.mxu0 0.0
    %346 = vmatpush1.msra.mxu0 0.0
    %347 = vmatprep.subr.mxu0 0.0
    %348 = vmatpush1.msra.mxu0 0.0
    %349 = vmatprep.subr.mxu0 0.0
    %350 = vmatpush1.msra.mxu0 0.0
    %351 = vmatprep.subr.mxu0 0.0
    %352 = vmatpush1.msra.mxu0 0.0
    %353 = vmatprep.subr.mxu0 0.0
    %354 = vmatpush1.msra.mxu0 0.0
    %355 = vmatprep.subr.mxu0 0.0
    %356 = vmatpush1.msra.mxu0 0.0
    %357 = vmatprep.subr.mxu0 0.0
    %358 = vmatpush1.msra.mxu0 0.0
    %359 = vmatprep.subr.mxu0 0.0
    %360 = vmatpush1.msra.mxu0 0.0
    %361 = vmatprep.subr.mxu0 0.0
    %362 = vmatpush1.msra.mxu0 0.0
    %363 = vmatprep.mubr.f32.mxu0 0.0
    %364 = vmatmul.mubr.f32.gmra.mrb[0].mxu0 %v274
    %v365 = vpop.f32.mrb[0].mxu0
    %v366 = vadd.f32 %v297, %v365
    %v367 = vpop.f32.mrb[0].mxu0
    %368 = vmatprep.mubr.f32.mxu0 0.0
    %369 = vmatmul.mubr.f32.gmra.mrb[0].mxu0 %v275
    %v370 = vpop.f32.mrb[0].mxu0
    %v371 = vadd.f32 %v297, %v370
    %v372 = vpop.f32.mrb[0].mxu0
    %373 = vdwg.mxu0
    %374 = vst [vmem:[#allocation8] sm:$0xff] %v366
    %375 = vst [vmem:[#allocation8 + $0x8] sm:$0xff] %v371
    // Predicated region
    $region50: #{tpu_custom_call.1} parent=1 // pred_check
      _
    $region51: #{tpu_custom_call.1} parent=1 // pred_check_branch
      %377 = sbr.rel (0) target = $region53
    $region52: #{tpu_custom_call.1} parent=1 // pred_region
      %s379 = ssub.s32 256, 256
      %380 = vsyncadd [#allocation4], %s379
      %s381 = sshll.u32 [#allocation8], 4
      %s382 = int_to_ptr.vmem [resolvable:$true] %s381
      %387 = dma.vmem_to_hbm [thread:$0]  %s382, 256, %s9, [#allocation4], 128, 128, 8
    $region53: #{tpu_custom_call.1} parent=1 // pred_fallthru
      _
    // Predicated region
    $region54: #{tpu_custom_call.1} parent=1 // pred_check
      _
    $region55: #{tpu_custom_call.1} parent=1 // pred_check_branch
      %389 = sbr.rel (0) target = $region57
    $region56: #{tpu_custom_call.1} parent=1 // pred_region
      %390 = dma.done [#allocation4], 256
    $region57: #{tpu_custom_call.1} parent=1 // pred_fallthru
      _
    %391 = vsyncpa [#allocation3], 1
    %392 = vsyncpa [#allocation6], 1
    %393 = vsyncpa [#allocation4], 1

// kernel: tpu_custom_call.1
$region0: #{tpu_custom_call.1}
  #allocation0 [shape = 'u32[]', space=smem, size = 0x4, offset = 0x4, fixed_abs, tag = 'smem constant byte address 0x4 - core index']
  #allocation1 [shape = 'u32[144,128]{1,0:T(1,128)}', space=vmem, size = 0x12000, scoped, tag = 'internal scratch']
  %s0 = inlined_call_operand.hbm [shape: f32[16,128], index: 0, kind: input, shape index: {}]
  %s1 = inlined_call_operand.vmem [shape: f32[1,128], index: 1, kind: input, shape index: {}]
  %s2 = inlined_call_operand.vmem [shape: f32[1,128], index: 2, kind: input, shape index: {}]
  %s3 = inlined_call_operand.hbm [shape: f32[128,128], index: 3, kind: input, shape index: {}]
  %s4 = inlined_call_operand.vmem [shape: f32[1,128], index: 4, kind: input, shape index: {}]
  %s5 = inlined_call_operand.vmem [shape: f32[1,128], index: 5, kind: input, shape index: {}]
  %s6 = inlined_call_operand.vmem [shape: f32[1,128], index: 6, kind: input, shape index: {}]
  %s7 = inlined_call_operand.hbm [shape: f32[128,128], index: 7, kind: input, shape index: {}]
  %s8 = inlined_call_operand.vmem [shape: f32[1,128], index: 8, kind: input, shape index: {}]
  %s9 = inlined_call_operand.hbm [shape: f32[16,128], index: 9, kind: output, shape index: {}]
  %s10 = sld [smem:[#allocation0]]
  $region58: #{tpu_custom_call.1} parent=0
    _
  %s12 = ssub.s32 1, %s10
  %s13 = scalar_select 0, %s12, %s10
  $region1: #{tpu_custom_call.1} parent=0
    #allocation2 [shape = 'u8[8192]{0}', space=vmem, size = 0x2000, scoped, tag = 'input window, operand 0, single buffered']
    #allocation3 [shape = 's32[1]{0}', space=sflag, size = 0x4, scoped, tag = 'scoped memory for tpu_custom_call.1']
    #allocation4 [shape = 's32[1]{0}', space=sflag, size = 0x4, scoped, tag = 'scoped memory for tpu_custom_call.1']
    #allocation5 [shape = 'u8[65536]{0}', space=vmem, size = 0x10000, scoped, tag = 'input window, operand 3, single buffered']
    #allocation6 [shape = 's32[1]{0}', space=sflag, size = 0x4, scoped, tag = 'scoped memory for tpu_custom_call.1']
    #allocation7 [shape = 'u8[65536]{0}', space=vmem, size = 0x10000, scoped, tag = 'input window, operand 7, single buffered']
    #allocation8 [shape = 'u8[8192]{0}', space=vmem, size = 0x2000, scoped, tag = 'output window, operand 0, single buffered']
    %14 = vsyncpa [#allocation3], 0
    %15 = vsyncpa [#allocation6], 0
    %16 = vsyncpa [#allocation4], 0
    // Predicated region
    $region2: #{tpu_custom_call.1} parent=1 // pred_check
      _
    $region3: #{tpu_custom_call.1} parent=1 // pred_check_branch
      %18 = sbr.rel (0) target = $region5
    $region4: #{tpu_custom_call.1} parent=1 // pred_region
      %s20 = ssub.s32 256, 256
      %21 = vsyncadd [#allocation3], %s20
      %s22 = sshll.u32 [#allocation2], 4
      %s23 = int_to_ptr.vmem [resolvable:$true] %s22
      %28 = dma.hbm_to_vmem [thread:$0]  %s0, 256, %s23, [#allocation3], 128, 128, 8
    $region5: #{tpu_custom_call.1} parent=1 // pred_fallthru
      _
    // Predicated region
    $region6: #{tpu_custom_call.1} parent=1 // pred_check
      _
    $region7: #{tpu_custom_call.1} parent=1 // pred_check_branch
      %30 = sbr.rel (0) target = $region9
    $region8: #{tpu_custom_call.1} parent=1 // pred_region
      _
    $region9: #{tpu_custom_call.1} parent=1 // pred_fallthru
      _
    // Predicated region
    $region10: #{tpu_custom_call.1} parent=1 // pred_check
      _
    $region11: #{tpu_custom_call.1} parent=1 // pred_check_branch
      %32 = sbr.rel (0) target = $region13
    $region12: #{tpu_custom_call.1} parent=1 // pred_region
      _
    $region13: #{tpu_custom_call.1} parent=1 // pred_fallthru
      _
    // Predicated region
    $region14: #{tpu_custom_call.1} parent=1 // pred_check
      _
    $region15: #{tpu_custom_call.1} parent=1 // pred_check_branch
      %34 = sbr.rel (0) target = $region17
    $region16: #{tpu_custom_call.1} parent=1 // pred_region
      %s36 = ssub.s32 2048, 2048
      %37 = vsyncadd [#allocation6], %s36
      %s38 = sshll.u32 [#allocation5], 4
      %s39 = int_to_ptr.vmem [resolvable:$true] %s38
      %44 = dma.hbm_to_vmem [thread:$0]  %s3, 2048, %s39, [#allocation6], 128, 128, 8
    $region17: #{tpu_custom_call.1} parent=1 // pred_fallthru
      _
    // Predicated region
    $region18: #{tpu_custom_call.1} parent=1 // pred_check
      _
    $region19: #{tpu_custom_call.1} parent=1 // pred_check_branch
      %46 = sbr.rel (0) target = $region21
    $region20: #{tpu_custom_call.1} parent=1 // pred_region
      _
    $region21: #{tpu_custom_call.1} parent=1 // pred_fallthru
      _
    // Predicated region
    $region22: #{tpu_custom_call.1} parent=1 // pred_check
      _
    $region23: #{tpu_custom_call.1} parent=1 // pred_check_branch
      %48 = sbr.rel (0) target = $region25
    $region24: #{tpu_custom_call.1} parent=1 // pred_region
      _
    $region25: #{tpu_custom_call.1} parent=1 // pred_fallthru
      _
    // Predicated region
    $region26: #{tpu_custom_call.1} parent=1 // pred_check
      _
    $region27: #{tpu_custom_call.1} parent=1 // pred_check_branch
      %50 = sbr.rel (0) target = $region29
    $region28: #{tpu_custom_call.1} parent=1 // pred_region
      _
    $region29: #{tpu_custom_call.1} parent=1 // pred_fallthru
      _
    // Predicated region
    $region30: #{tpu_custom_call.1} parent=1 // pred_check
      _
    $region31: #{tpu_custom_call.1} parent=1 // pred_check_branch
      %52 = sbr.rel (0) target = $region33
    $region32: #{tpu_custom_call.1} parent=1 // pred_region
      %s54 = ssub.s32 2048, 2048
      %55 = vsyncadd [#allocation6], %s54
      %s56 = sshll.u32 [#allocation7], 4
      %s57 = int_to_ptr.vmem [resolvable:$true] %s56
      %62 = dma.hbm_to_vmem [thread:$0]  %s7, 2048, %s57, [#allocation6], 128, 128, 8
    $region33: #{tpu_custom_call.1} parent=1 // pred_fallthru
      _
    // Predicated region
    $region34: #{tpu_custom_call.1} parent=1 // pred_check
      _
    $region35: #{tpu_custom_call.1} parent=1 // pred_check_branch
      %64 = sbr.rel (0) target = $region37
    $region36: #{tpu_custom_call.1} parent=1 // pred_region
      _
    $region37: #{tpu_custom_call.1} parent=1 // pred_fallthru
      _
    // Predicated region
    $region38: #{tpu_custom_call.1} parent=1 // pred_check
      _
    $region39: #{tpu_custom_call.1} parent=1 // pred_check_branch
      %66 = sbr.rel (0) target = $region41
    $region40: #{tpu_custom_call.1} parent=1 // pred_region
      %67 = dma.done [#allocation3], 256
    $region41: #{tpu_custom_call.1} parent=1 // pred_fallthru
      _
    // Predicated region
    $region42: #{tpu_custom_call.1} parent=1 // pred_check
      _
    $region43: #{tpu_custom_call.1} parent=1 // pred_check_branch
      %69 = sbr.rel (0) target = $region45
    $region44: #{tpu_custom_call.1} parent=1 // pred_region
      %70 = dma.done [#allocation6], 2048
    $region45: #{tpu_custom_call.1} parent=1 // pred_fallthru
      _
    // Predicated region
    $region46: #{tpu_custom_call.1} parent=1 // pred_check
      _
    $region47: #{tpu_custom_call.1} parent=1 // pred_check_branch
      %72 = sbr.rel (0) target = $region49
    $region48: #{tpu_custom_call.1} parent=1 // pred_region
      %73 = dma.done [#allocation6], 2048
    $region49: #{tpu_custom_call.1} parent=1 // pred_fallthru
      _
    %v74 = vld [vmem:[#allocation2] sm:$0xff]
    %v75 = vld [vmem:[#allocation2 + $0x8] sm:$0xff]
    %76 = vadd.xlane.f32.xlu0 %v74
    %v77 = vpop.xlane.xlu0 %76
    %78 = vadd.xlane.f32.xlu0 %v75
    %v79 = vpop.xlane.xlu0 %78
    %v80 = vmul.f32 %v74, %v74
    %v81 = vmul.f32 %v75, %v75
    %82 = vadd.xlane.f32.xlu0 %v80
    %v83 = vpop.xlane.xlu0 %82
    %84 = vadd.xlane.f32.xlu0 %v81
    %v85 = vpop.xlane.xlu0 %84
    %v86 = vmul.f32 %v77, 0.03125
    %v87 = vmul.f32 %v79, 0.03125
    %v88 = vmul.f32 %v83, 0.03125
    %v89 = vmul.f32 %v85, 0.03125
    %v90 = vmul.f32 %v86, %v86
    %v91 = vmul.f32 %v87, %v87
    %v92 = vsub.f32 %v88, %v90
    %v93 = vsub.f32 %v89, %v91
    %v94 = vmax.f32 %v92, 0.0
    %v95 = vmax.f32 %v93, 0.0
    %v96 = vsub.f32 %v74, %v86
    %v97 = vsub.f32 %v75, %v87
    %v98 = vadd.f32 %v94, 1e-05
    %v99 = vadd.f32 %v95, 1e-05
    %v100 = vrsqrt.pop %v98
    %v101 = vrsqrt.pop %v99
    %v102 = vmul.f32 %v96, %v100
    %v103 = vmul.f32 %v97, %v101
    %v104 = vld [vmem:[%s1] sm:$0x1]
    %v106 = vlaneseq
    %v107 = vshrl.u32 %v106, 7
    %v108 = vsub.s32 0, %v107
    %v109 = vrot.slane %v104, %v108
    %v111 = vmul.f32 %v102, %v109
    %v112 = vmul.f32 %v103, %v109
    %v113 = vld [vmem:[%s2] sm:$0x1]
    %v115 = vlaneseq
    %v116 = vshrl.u32 %v115, 7
    %v117 = vsub.s32 0, %v116
    %v118 = vrot.slane %v113, %v117
    %v120 = vadd.f32 %v111, %v118
    %v121 = vadd.f32 %v112, %v118
    %v122 = vld [vmem:[#allocation5] sm:$0xff]
    %v123 = vld [vmem:[#allocation5 + $0x8] sm:$0xff]
    %v124 = vld [vmem:[#allocation5 + $0x10] sm:$0xff]
    %v125 = vld [vmem:[#allocation5 + $0x18] sm:$0xff]
    %v126 = vld [vmem:[#allocation5 + $0x20] sm:$0xff]
    %v127 = vld [vmem:[#allocation5 + $0x28] sm:$0xff]
    %v128 = vld [vmem:[#allocation5 + $0x30] sm:$0xff]
    %v129 = vld [vmem:[#allocation5 + $0x38] sm:$0xff]
    %v130 = vld [vmem:[#allocation5 + $0x40] sm:$0xff]
    %v131 = vld [vmem:[#allocation5 + $0x48] sm:$0xff]
    %v132 = vld [vmem:[#allocation5 + $0x50] sm:$0xff]
    %v133 = vld [vmem:[#allocation5 + $0x58] sm:$0xff]
    %v134 = vld [vmem:[#allocation5 + $0x60] sm:$0xff]
    %v135 = vld [vmem:[#allocation5 + $0x68] sm:$0xff]
    %v136 = vld [vmem:[#allocation5 + $0x70] sm:$0xff]
    %v137 = vld [vmem:[#allocation5 + $0x78] sm:$0xff]
    %v138 = vld [vmem:[%s4] sm:$0x1]
    %v140 = vlaneseq
    %v141 = vshrl.u32 %v140, 7
    %v142 = vsub.s32 0, %v141
    %v143 = vrot.slane %v138, %v142
    %145 = vmatprep.subr.mxu0 0.0
    %146 = vmatpush1.msra.mxu0 %v122
    %147 = vmatprep.subr.mxu0 0.0
    %148 = vmatpush1.msra.mxu0 %v123
    %149 = vmatprep.subr.mxu0 0.0
    %150 = vmatpush1.msra.mxu0 %v124
    %151 = vmatprep.subr.mxu0 0.0
    %152 = vmatpush1.msra.mxu0 %v125
    %153 = vmatprep.subr.mxu0 0.0
    %154 = vmatpush1.msra.mxu0 %v126
    %155 = vmatprep.subr.mxu0 0.0
    %156 = vmatpush1.msra.mxu0 %v127
    %157 = vmatprep.subr.mxu0 0.0
    %158 = vmatpush1.msra.mxu0 %v128
    %159 = vmatprep.subr.mxu0 0.0
    %160 = vmatpush1.msra.mxu0 %v129
    %161 = vmatprep.subr.mxu0 0.0
    %162 = vmatpush1.msra.mxu0 %v130
    %163 = vmatprep.subr.mxu0 0.0
    %164 = vmatpush1.msra.mxu0 %v131
    %165 = vmatprep.subr.mxu0 0.0
    %166 = vmatpush1.msra.mxu0 %v132
    %167 = vmatprep.subr.mxu0 0.0
    %168 = vmatpush1.msra.mxu0 %v133
    %169 = vmatprep.subr.mxu0 0.0
    %170 = vmatpush1.msra.mxu0 %v134
    %171 = vmatprep.subr.mxu0 0.0
    %172 = vmatpush1.msra.mxu0 %v135
    %173 = vmatprep.subr.mxu0 0.0
    %174 = vmatpush1.msra.mxu0 %v136
    %175 = vmatprep.subr.mxu0 0.0
    %176 = vmatpush1.msra.mxu0 %v137
    %177 = vmatprep.subr.mxu0 0.0
    %178 = vmatpush1.msra.mxu0 0.0
    %179 = vmatprep.subr.mxu0 0.0
    %180 = vmatpush1.msra.mxu0 0.0
    %181 = vmatprep.subr.mxu0 0.0
    %182 = vmatpush1.msra.mxu0 0.0
    %183 = vmatprep.subr.mxu0 0.0
    %184 = vmatpush1.msra.mxu0 0.0
    %185 = vmatprep.subr.mxu0 0.0
    %186 = vmatpush1.msra.mxu0 0.0
    %187 = vmatprep.subr.mxu0 0.0
    %188 = vmatpush1.msra.mxu0 0.0
    %189 = vmatprep.subr.mxu0 0.0
    %190 = vmatpush1.msra.mxu0 0.0
    %191 = vmatprep.subr.mxu0 0.0
    %192 = vmatpush1.msra.mxu0 0.0
    %193 = vmatprep.subr.mxu0 0.0
    %194 = vmatpush1.msra.mxu0 0.0
    %195 = vmatprep.subr.mxu0 0.0
    %196 = vmatpush1.msra.mxu0 0.0
    %197 = vmatprep.subr.mxu0 0.0
    %198 = vmatpush1.msra.mxu0 0.0
    %199 = vmatprep.subr.mxu0 0.0
    %200 = vmatpush1.msra.mxu0 0.0
    %201 = vmatprep.subr.mxu0 0.0
    %202 = vmatpush1.msra.mxu0 0.0
    %203 = vmatprep.subr.mxu0 0.0
    %204 = vmatpush1.msra.mxu0 0.0
    %205 = vmatprep.subr.mxu0 0.0
    %206 = vmatpush1.msra.mxu0 0.0
    %207 = vmatprep.subr.mxu0 0.0
    %208 = vmatpush1.msra.mxu0 0.0
    %209 = vmatprep.mubr.f32.mxu0 0.0
    %210 = vmatmul.mubr.f32.gmra.mrb[0].mxu0 %v120
    %v211 = vpop.f32.mrb[0].mxu0
    %v212 = vadd.f32 %v143, %v211
    %v213 = vpop.f32.mrb[0].mxu0
    %214 = vmatprep.mubr.f32.mxu0 0.0
    %215 = vmatmul.mubr.f32.gmra.mrb[0].mxu0 %v121
    %v216 = vpop.f32.mrb[0].mxu0
    %v217 = vadd.f32 %v143, %v216
    %v218 = vpop.f32.mrb[0].mxu0
    %219 = vdwg.mxu0
    %v220 = vmul.f32 %v212, 0.5
    %v221 = vmul.f32 %v217, 0.5
    %v222 = vmul.f32 %v212, 0.70710677
    %v223 = vmul.f32 %v217, 0.70710677
    %v224 = verf.f32.pop %v222
    %v225 = verf.f32.pop %v223
    %v226 = vadd.f32 %v224, 1.0
    %v227 = vadd.f32 %v225, 1.0
    %v228 = vmul.f32 %v220, %v226
    %v229 = vmul.f32 %v221, %v227
    %230 = vadd.xlane.f32.xlu0 %v228
    %v231 = vpop.xlane.xlu0 %230
    %232 = vadd.xlane.f32.xlu0 %v229
    %v233 = vpop.xlane.xlu0 %232
    %v234 = vmul.f32 %v228, %v228
    %v235 = vmul.f32 %v229, %v229
    %236 = vadd.xlane.f32.xlu0 %v234
    %v237 = vpop.xlane.xlu0 %236
    %238 = vadd.xlane.f32.xlu0 %v235
    %v239 = vpop.xlane.xlu0 %238
    %v240 = vmul.f32 %v231, 0.015625
    %v241 = vmul.f32 %v233, 0.015625
    %v242 = vmul.f32 %v237, 0.015625
    %v243 = vmul.f32 %v239, 0.015625
    %v244 = vmul.f32 %v240, %v240
    %v245 = vmul.f32 %v241, %v241
    %v246 = vsub.f32 %v242, %v244
    %v247 = vsub.f32 %v243, %v245
    %v248 = vmax.f32 %v246, 0.0
    %v249 = vmax.f32 %v247, 0.0
    %v250 = vsub.f32 %v228, %v240
    %v251 = vsub.f32 %v229, %v241
    %v252 = vadd.f32 %v248, 1e-05
    %v253 = vadd.f32 %v249, 1e-05
    %v254 = vrsqrt.pop %v252
    %v255 = vrsqrt.pop %v253
    %v256 = vmul.f32 %v250, %v254
    %v257 = vmul.f32 %v251, %v255
    %v258 = vld [vmem:[%s5] sm:$0x1]
    %v260 = vlaneseq
    %v261 = vshrl.u32 %v260, 7
    %v262 = vsub.s32 0, %v261
    %v263 = vrot.slane %v258, %v262
    %v265 = vmul.f32 %v256, %v263
    %v266 = vmul.f32 %v257, %v263
    %v267 = vld [vmem:[%s6] sm:$0x1]
    %v269 = vlaneseq
    %v270 = vshrl.u32 %v269, 7
    %v271 = vsub.s32 0, %v270
    %v272 = vrot.slane %v267, %v271
    %v274 = vadd.f32 %v265, %v272
    %v275 = vadd.f32 %v266, %v272
    %v276 = vld [vmem:[#allocation7] sm:$0xff]
    %v277 = vld [vmem:[#allocation7 + $0x8] sm:$0xff]
    %v278 = vld [vmem:[#allocation7 + $0x10] sm:$0xff]
    %v279 = vld [vmem:[#allocation7 + $0x18] sm:$0xff]
    %v280 = vld [vmem:[#allocation7 + $0x20] sm:$0xff]
    %v281 = vld [vmem:[#allocation7 + $0x28] sm:$0xff]
    %v282 = vld [vmem:[#allocation7 + $0x30] sm:$0xff]
    %v283 = vld [vmem:[#allocation7 + $0x38] sm:$0xff]
    %v284 = vld [vmem:[#allocation7 + $0x40] sm:$0xff]
    %v285 = vld [vmem:[#allocation7 + $0x48] sm:$0xff]
    %v286 = vld [vmem:[#allocation7 + $0x50] sm:$0xff]
    %v287 = vld [vmem:[#allocation7 + $0x58] sm:$0xff]
    %v288 = vld [vmem:[#allocation7 + $0x60] sm:$0xff]
    %v289 = vld [vmem:[#allocation7 + $0x68] sm:$0xff]
    %v290 = vld [vmem:[#allocation7 + $0x70] sm:$0xff]
    %v291 = vld [vmem:[#allocation7 + $0x78] sm:$0xff]
    %v292 = vld [vmem:[%s8] sm:$0x1]
    %v294 = vlaneseq
    %v295 = vshrl.u32 %v294, 7
    %v296 = vsub.s32 0, %v295
    %v297 = vrot.slane %v292, %v296
    %299 = vmatprep.subr.mxu0 0.0
    %300 = vmatpush1.msra.mxu0 %v276
    %301 = vmatprep.subr.mxu0 0.0
    %302 = vmatpush1.msra.mxu0 %v277
    %303 = vmatprep.subr.mxu0 0.0
    %304 = vmatpush1.msra.mxu0 %v278
    %305 = vmatprep.subr.mxu0 0.0
    %306 = vmatpush1.msra.mxu0 %v279
    %307 = vmatprep.subr.mxu0 0.0
    %308 = vmatpush1.msra.mxu0 %v280
    %309 = vmatprep.subr.mxu0 0.0
    %310 = vmatpush1.msra.mxu0 %v281
    %311 = vmatprep.subr.mxu0 0.0
    %312 = vmatpush1.msra.mxu0 %v282
    %313 = vmatprep.subr.mxu0 0.0
    %314 = vmatpush1.msra.mxu0 %v283
    %315 = vmatprep.subr.mxu0 0.0
    %316 = vmatpush1.msra.mxu0 %v284
    %317 = vmatprep.subr.mxu0 0.0
    %318 = vmatpush1.msra.mxu0 %v285
    %319 = vmatprep.subr.mxu0 0.0
    %320 = vmatpush1.msra.mxu0 %v286
    %321 = vmatprep.subr.mxu0 0.0
    %322 = vmatpush1.msra.mxu0 %v287
    %323 = vmatprep.subr.mxu0 0.0
    %324 = vmatpush1.msra.mxu0 %v288
    %325 = vmatprep.subr.mxu0 0.0
    %326 = vmatpush1.msra.mxu0 %v289
    %327 = vmatprep.subr.mxu0 0.0
    %328 = vmatpush1.msra.mxu0 %v290
    %329 = vmatprep.subr.mxu0 0.0
    %330 = vmatpush1.msra.mxu0 %v291
    %331 = vmatprep.subr.mxu0 0.0
    %332 = vmatpush1.msra.mxu0 0.0
    %333 = vmatprep.subr.mxu0 0.0
    %334 = vmatpush1.msra.mxu0 0.0
    %335 = vmatprep.subr.mxu0 0.0
    %336 = vmatpush1.msra.mxu0 0.0
    %337 = vmatprep.subr.mxu0 0.0
    %338 = vmatpush1.msra.mxu0 0.0
    %339 = vmatprep.subr.mxu0 0.0
    %340 = vmatpush1.msra.mxu0 0.0
    %341 = vmatprep.subr.mxu0 0.0
    %342 = vmatpush1.msra.mxu0 0.0
    %343 = vmatprep.subr.mxu0 0.0
    %344 = vmatpush1.msra.mxu0 0.0
    %345 = vmatprep.subr.mxu0 0.0
    %346 = vmatpush1.msra.mxu0 0.0
    %347 = vmatprep.subr.mxu0 0.0
    %348 = vmatpush1.msra.mxu0 0.0
    %349 = vmatprep.subr.mxu0 0.0
    %350 = vmatpush1.msra.mxu0 0.0
    %351 = vmatprep.subr.mxu0 0.0
    %352 = vmatpush1.msra.mxu0 0.0
    %353 = vmatprep.subr.mxu0 0.0
    %354 = vmatpush1.msra.mxu0 0.0
    %355 = vmatprep.subr.mxu0 0.0
    %356 = vmatpush1.msra.mxu0 0.0
    %357 = vmatprep.subr.mxu0 0.0
    %358 = vmatpush1.msra.mxu0 0.0
    %359 = vmatprep.subr.mxu0 0.0
    %360 = vmatpush1.msra.mxu0 0.0
    %361 = vmatprep.subr.mxu0 0.0
    %362 = vmatpush1.msra.mxu0 0.0
    %363 = vmatprep.mubr.f32.mxu0 0.0
    %364 = vmatmul.mubr.f32.gmra.mrb[0].mxu0 %v274
    %v365 = vpop.f32.mrb[0].mxu0
    %v366 = vadd.f32 %v297, %v365
    %v367 = vpop.f32.mrb[0].mxu0
    %368 = vmatprep.mubr.f32.mxu0 0.0
    %369 = vmatmul.mubr.f32.gmra.mrb[0].mxu0 %v275
    %v370 = vpop.f32.mrb[0].mxu0
    %v371 = vadd.f32 %v297, %v370
    %v372 = vpop.f32.mrb[0].mxu0
    %373 = vdwg.mxu0
    %374 = vst [vmem:[#allocation8] sm:$0xff] %v366
    %375 = vst [vmem:[#allocation8 + $0x8] sm:$0xff] %v371
    // Predicated region
    $region50: #{tpu_custom_call.1} parent=1 // pred_check
      _
    $region51: #{tpu_custom_call.1} parent=1 // pred_check_branch
      %377 = sbr.rel (0) target = $region53
    $region52: #{tpu_custom_call.1} parent=1 // pred_region
      %s379 = ssub.s32 256, 256
      %380 = vsyncadd [#allocation4], %s379
      %s381 = sshll.u32 [#allocation8], 4
      %s382 = int_to_ptr.vmem [resolvable:$true] %s381
      %387 = dma.vmem_to_hbm [thread:$0]  %s382, 256, %s9, [#allocation4], 128, 128, 8
    $region53: #{tpu_custom_call.1} parent=1 // pred_fallthru
      _
    // Predicated region
    $region54: #{tpu_custom_call.1} parent=1 // pred_check
      _
    $region55: #{tpu_custom_call.1} parent=1 // pred_check_branch
      %389 = sbr.rel (0) target = $region57
    $region56: #{tpu_custom_call.1} parent=1 // pred_region
      %390 = dma.done [#allocation4], 256
    $region57: #{tpu_custom_call.1} parent=1 // pred_fallthru
      _
    %391 = vsyncpa [#allocation3], 1
    %392 = vsyncpa [#allocation6], 1
    %393 = vsyncpa [#allocation4], 1

</llo_original>
